<compile_context>
chip_gen: v6e
topology: v6e:2x2x1
jax: 0.10.0
libtpu: 0.0.40
codegen_flags: <defaults>
</compile_context>

<pallas_src>
import functools

import jax
import jax.numpy as jnp
from jax import lax
from jax.experimental import pallas as pl
from jax.experimental.pallas import tpu as pltpu


_SMALL_C_MAX = 32                      # dense VPU channel-contraction path up to this C
_VMEM_BUDGET_BYTES = 24 * 1024 * 1024  # streaming working set target (fits all gens)
_VMEM_LIMIT_BYTES = 32 * 1024 * 1024   # explicit scoped-VMEM limit handed to Mosaic
_VREG_BUDGET = 48                      # vreg budget for the hoisted slabs in the VPU path


# ------------------------------ tile sizing helpers ------------------------------

def _dense_tiles(n_channels, s_rows, dtype_bytes):
    """Row tile (BlockSpec) and inner chunk rows for the dense (rows, 128) VPU path."""
    # Inner chunk: keep (C prev slabs + acc + x slab) under ~_VREG_BUDGET f32 vregs.
    chunk = max(8, ((_VREG_BUDGET * 8) // (n_channels + 3)) // 8 * 8)
    # Per-row bytes across 3 streams (x, prev, out) x 2 pipeline buffers.
    per_row = 6 * n_channels * 128 * dtype_bytes
    budget_rows = max(chunk, (_VMEM_BUDGET_BYTES // per_row) // chunk * chunk)
    if s_rows <= budget_rows:
        return s_rows, min(chunk, s_rows)      # full-dim block (always legal)
    return budget_rows, chunk                  # multiple of chunk (multiple of 8)


def _flat_tile(n_channels, s, dtype_bytes):
    """Lane tile for the flat (1, C, tile_s) MXU path, budget minus resident weight."""
    w_bytes = 2 * n_channels * n_channels * 4          # (C, C) f32, assume double buffer
    per_col = 6 * n_channels * dtype_bytes             # 3 streams x 2 buffers per lane col
    avail = max(_VMEM_BUDGET_BYTES - w_bytes, per_col * 128)
    tile_s = max(128, (avail // per_col) // 128 * 128)
    return s if tile_s >= s else tile_s


# --------------------------------- kernels ---------------------------------------

def _conv1x1_vpu_kernel(w_ref, b_ref, x_ref, prev_ref, out_ref, *,
                        n_channels, apply_relu, chunk_rows):
    """Small-C path: dense (rows, 128) slabs per channel, unrolled channel FMAs on VPU.

    w_ref: (C, C) SMEM [out, in], b_ref: (C,) SMEM,
    x_ref / prev_ref / out_ref: (1, C, tile_r, 128) VMEM.
    """
    tile_r = x_ref.shape[2]

    def process(r0, cr):
        # Hoist prev-channel slabs: loaded once, reused for every output channel.
        prev = [prev_ref[0, ci, pl.ds(r0, cr), :].astype(jnp.float32)
                for ci in range(n_channels)]
        for co in range(n_channels):
            acc = x_ref[0, co, pl.ds(r0, cr), :].astype(jnp.float32) + b_ref[co]
            for ci in range(n_channels):
                acc = acc + w_ref[co, ci] * prev[ci]
            if apply_relu:
                acc = jnp.maximum(acc, 0.0)
            out_ref[0, co, pl.ds(r0, cr), :] = acc.astype(out_ref.dtype)

    n_full = tile_r // chunk_rows
    rem = tile_r - n_full * chunk_rows
    if n_full > 0:
        def body(i, carry):
            process(pl.multiple_of(i * chunk_rows, chunk_rows), chunk_rows)
            return carry
        lax.fori_loop(0, n_full, body, 0)
    if rem > 0:
        process(n_full * chunk_rows, rem)


def _conv1x1_mxu_kernel(w_ref, b_ref, x_ref, prev_ref, out_ref, *, apply_relu):
    """Large-C path: W @ prev on the MXU, lane-dense on the flattened position axis.

    w_ref: (C, C) VMEM [out, in], b_ref: (C, 1) VMEM,
    x_ref / prev_ref / out_ref: (1, C, tile_s) VMEM.
    """
    xr = jnp.dot(w_ref[...], prev_ref[0], preferred_element_type=jnp.float32)
    y = x_ref[0].astype(jnp.float32) + xr + b_ref[...]
    if apply_relu:
        y = jnp.maximum(y, 0.0)
    out_ref[0] = y.astype(out_ref.dtype)


def _linear_mxu_kernel(wt_ref, b_ref, x_ref, prev_ref, out_ref):
    """Large-C linear: prev @ W^T with W pre-transposed in the wrapper (plain MXU dot).

    wt_ref: (C_in, tile_n) VMEM, b_ref: (1, tile_n) VMEM,
    x_ref / out_ref: (tile_b, tile_n) VMEM, prev_ref: (tile_b, C_in) VMEM.
    """
    xr = jnp.dot(prev_ref[...], wt_ref[...], preferred_element_type=jnp.float32)
    y = x_ref[...].astype(jnp.float32) + xr + b_ref[...]
    out_ref[...] = y.astype(out_ref.dtype)


# --------------------------- channels-on-sublanes driver --------------------------

def _lateral_channels_lanes(x3, p3, w, b, *, apply_relu):
    """Shared driver: x3/p3 are (N, C, S) with channels on sublanes, positions on lanes."""
    n, c, s = x3.shape
    dtype_bytes = x3.dtype.itemsize

    if c <= _SMALL_C_MAX and s % 128 == 0:
        # ---- dense VPU path: (N, C, S//128, 128), sublane- and lane-dense slabs ----
        s_rows = s // 128
        tile_r, chunk = _dense_tiles(c, s_rows, dtype_bytes)
        x4 = x3.reshape(n, c, s_rows, 128)
        p4 = p3.reshape(n, c, s_rows, 128)
        data_spec = pl.BlockSpec((1, c, tile_r, 128), lambda ni, si: (ni, 0, si, 0))
        kernel = functools.partial(_conv1x1_vpu_kernel, n_channels=c,
                                   apply_relu=apply_relu, chunk_rows=chunk)
        out4 = pl.pallas_call(
            kernel,
            out_shape=jax.ShapeDtypeStruct((n, c, s_rows, 128), x3.dtype),
            grid_spec=pltpu.PrefetchScalarGridSpec(
                num_scalar_prefetch=0,
                grid=(n, pl.cdiv(s_rows, tile_r)),
                in_specs=[
                    pl.BlockSpec(memory_space=pltpu.MemorySpace.SMEM),  # W (scalars)
                    pl.BlockSpec(memory_space=pltpu.MemorySpace.SMEM),  # bias (scalars)
                    data_spec,                                          # x
                    data_spec,                                          # previous_input
                ],
                out_specs=data_spec),
            compiler_params=pltpu.CompilerParams(
                dimension_semantics=("parallel", "parallel"),
                vmem_limit_bytes=_VMEM_LIMIT_BYTES),
        )(w.astype(jnp.float32), b.astype(jnp.float32), x4, p4)
        return out4.reshape(n, c, s)

    # ---- MXU path on the flat (N, C, S) layout (resident weight, lane-dense S) ----
    tile_s = _flat_tile(c, s, dtype_bytes)
    data_spec = pl.BlockSpec((1, c, tile_s), lambda ni, si: (ni, 0, si))
    kernel = functools.partial(_conv1x1_mxu_kernel, apply_relu=apply_relu)
    out3 = pl.pallas_call(
        kernel,
        out_shape=jax.ShapeDtypeStruct((n, c, s), x3.dtype),
        grid_spec=pltpu.PrefetchScalarGridSpec(
            num_scalar_prefetch=0,
            grid=(n, pl.cdiv(s, tile_s)),
            in_specs=[
                pl.BlockSpec((c, c), lambda ni, si: (0, 0)),   # W [out, in], resident
                pl.BlockSpec((c, 1), lambda ni, si: (0, 0)),   # bias column, resident
                data_spec,                                     # x
                data_spec,                                     # previous_input
            ],
            out_specs=data_spec),
        compiler_params=pltpu.CompilerParams(
            dimension_semantics=("parallel", "parallel"),
            vmem_limit_bytes=_VMEM_LIMIT_BYTES),
    )(w.astype(jnp.float32), b.astype(jnp.float32).reshape(c, 1), x3, p3)
    return out3


# ------------------------------ large-C linear branch -----------------------------

def _linear_mxu(x, prev, w, b):
    bsz, c = x.shape
    dtype_bytes = x.dtype.itemsize
    wt = jnp.transpose(w)                       # (C_in, C_out): one-time wrapper transpose
    tile_n = c if c <= 256 else 256             # output-channel tile (mult of 128 or full)
    w_bytes = 2 * c * tile_n * 4
    denom = 2 * c * dtype_bytes + 4 * tile_n * dtype_bytes
    avail = max(_VMEM_BUDGET_BYTES - w_bytes, denom * 8)
    tile_b = max(8, (avail // denom) // 8 * 8)
    if tile_b >= bsz:
        tile_b = bsz                            # full dim -> always a legal block

    out = pl.pallas_call(
        _linear_mxu_kernel,
        out_shape=jax.ShapeDtypeStruct((bsz, c), x.dtype),
        grid_spec=pltpu.PrefetchScalarGridSpec(
            num_scalar_prefetch=0,
            grid=(pl.cdiv(bsz, tile_b), pl.cdiv(c, tile_n)),
            in_specs=[
                pl.BlockSpec((c, tile_n), lambda i, j: (0, j)),       # W^T, out-col tiled
                pl.BlockSpec((1, tile_n), lambda i, j: (0, j)),       # bias
                pl.BlockSpec((tile_b, tile_n), lambda i, j: (i, j)),  # x
                pl.BlockSpec((tile_b, c), lambda i, j: (i, 0)),       # previous_input
            ],
            out_specs=pl.BlockSpec((tile_b, tile_n), lambda i, j: (i, j))),
        compiler_params=pltpu.CompilerParams(
            dimension_semantics=("parallel", "parallel"),
            vmem_limit_bytes=_VMEM_LIMIT_BYTES),
    )(wt, b.reshape(1, c), x, prev)
    return out


# ----------------------------------- forward --------------------------------------

def lateral_recurrence_forward(x, previous_input, w, b):
    """Pallas implementation of LateralRecurrence.forward.

    4D input (conv branch):   x, previous_input are NCHW; 1x1 conv + add + relu.
    2D input (linear branch): x, previous_input are (B, C); linear + add (no relu).
    Returns (x_out, new_actv) -- identical arrays, matching the PyTorch module.
    """
    if x.ndim == 4:
        n, c, h, wsp = x.shape
        out3 = _lateral_channels_lanes(
            x.reshape(n, c, h * wsp), previous_input.reshape(n, c, h * wsp),
            w, b, apply_relu=True)
        out = out3.reshape(n, c, h, wsp)
        return out, out
    if x.ndim == 2:
        bsz, c = x.shape
        if c < 128:
            # Lane-sparse (B, C): route channel-major so batch sits on the lane axis.
            xt = jnp.transpose(x)[None]                  # (1, C, B)
            pt = jnp.transpose(previous_input)[None]
            out_t = _lateral_channels_lanes(xt, pt, w, b, apply_relu=False)[0]
            out = jnp.transpose(out_t)                   # back to (B, C)
        else:
            out = _linear_mxu(x, previous_input, w, b)
        return out, out
    raise ValueError("Shape of input is not 2D or 4D.")


# ---------------------------------- reference --------------------------------------

def _reference_forward(x, previous_input, w, b):
    if x.ndim == 4:
        xr = jnp.einsum("oc,nchw->nohw", w, previous_input) + b[None, :, None, None]
        return jnp.maximum(x + xr, 0.0)
    xr = previous_input @ w.T + b
    return x + xr


if __name__ == "__main__":
    key = jax.random.PRNGKey(0)
    ks = jax.random.split(key, 16)

    def check(got, ref):
        assert got.shape == ref.shape
        assert jnp.allclose(got, ref, atol=1e-2, rtol=1e-2), (
            float(jnp.max(jnp.abs(got - ref))))

    # ---- conv branch, small C (dense sublane/lane VPU path): NCHW, C=4 ----
    N, C, H, W = 2, 4, 16, 16
    x = jax.random.normal(ks[0], (N, C, H, W), dtype=jnp.float32)
    prev = jax.random.normal(ks[1], (N, C, H, W), dtype=jnp.float32)
    w = jax.random.normal(ks[2], (C, C), dtype=jnp.float32) * (1.0 / jnp.sqrt(C))
    b = jax.random.normal(ks[3], (C,), dtype=jnp.float32) * 0.1
    out4, new4 = lateral_recurrence_forward(x, prev, w, b)
    out4 = jax.block_until_ready(out4)
    check(out4, _reference_forward(x, prev, w, b))

    # ---- conv branch, larger C (MXU flat path): C=40 ----
    C2 = 40
    x2 = jax.random.normal(ks[4], (N, C2, H, W), dtype=jnp.float32)
    p2 = jax.random.normal(ks[5], (N, C2, H, W), dtype=jnp.float32)
    w2 = jax.random.normal(ks[6], (C2, C2), dtype=jnp.float32) * (1.0 / jnp.sqrt(C2))
    b2 = jax.random.normal(ks[7], (C2,), dtype=jnp.float32) * 0.1
    outc2, _ = lateral_recurrence_forward(x2, p2, w2, b2)
    outc2 = jax.block_until_ready(outc2)
    check(outc2, _reference_forward(x2, p2, w2, b2))

    # ---- linear branch, small C (channel-major routing): (B, C) = (8, 4) ----
    B = 8
    xl = jax.random.normal(ks[8], (B, C), dtype=jnp.float32)
    pl_ = jax.random.normal(ks[9], (B, C), dtype=jnp.float32)
    outl, _ = lateral_recurrence_forward(xl, pl_, w, b)
    outl = jax.block_until_ready(outl)
    check(outl, _reference_forward(xl, pl_, w, b))

    # ---- linear branch, large C (row x out-channel tiled MXU): (B, C) = (16, 128) ----
    B3, C3 = 16, 128
    x3 = jax.random.normal(ks[10], (B3, C3), dtype=jnp.float32)
    p3 = jax.random.normal(ks[11], (B3, C3), dtype=jnp.float32)
    w3 = jax.random.normal(ks[12], (C3, C3), dtype=jnp.float32) * (1.0 / jnp.sqrt(C3))
    b3 = jax.random.normal(ks[13], (C3,), dtype=jnp.float32) * 0.1
    out3, _ = lateral_recurrence_forward(x3, p3, w3, b3)
    out3 = jax.block_until_ready(out3)
    check(out3, _reference_forward(x3, p3, w3, b3))

    print("KERNEL_OK")
</pallas_src>

<mosaic_0001>
module attributes {stable_mosaic.version = 11 : i64} {
  func.func @_conv1x1_vpu_kernel(%arg0: i32, %arg1: i32, %arg2: memref<4x4xf32, #tpu.memory_space<smem>>, %arg3: memref<4xf32, #tpu.memory_space<smem>>, %arg4: memref<1x4x2x128xf32, #tpu.memory_space<vmem>>, %arg5: memref<1x4x2x128xf32, #tpu.memory_space<vmem>>, %arg6: memref<1x4x2x128xf32, #tpu.memory_space<vmem>>) attributes {dimension_semantics = [#tpu.dimension_semantics<parallel>, #tpu.dimension_semantics<parallel>], iteration_bounds = array<i64: 2, 1>, scalar_prefetch = 0 : i64, scratch_operands = 0 : i64, tpu.core_type = #tpu.core_type<tc>, window_params = [{transform_indices = @transform_0, window_bounds = array<i64: 4, 4>}, {transform_indices = @transform_1, window_bounds = array<i64: 4>}, {transform_indices = @transform_2, window_bounds = array<i64: 1, 4, 2, 128>}, {transform_indices = @transform_3, window_bounds = array<i64: 1, 4, 2, 128>}, {transform_indices = @transform_4, window_bounds = array<i64: 1, 4, 2, 128>}]} {
    %c0_i32 = arith.constant 0 : i32
    %c2_i32 = arith.constant 2 : i32
    %0 = arith.muli %c0_i32, %c2_i32 : i32
    %1 = tpu.assume_multiple %0, 2 : i32
    %c0 = arith.constant 0 : index
    %c0_0 = arith.constant 0 : index
    %2 = arith.index_cast %1 : i32 to index
    %c0_1 = arith.constant 0 : index
    %3 = vector.load %arg5[%c0, %c0_0, %2, %c0_1] : memref<1x4x2x128xf32, #tpu.memory_space<vmem>>, vector<1x1x2x128xf32>
    %4 = vector.shape_cast %3 : vector<1x1x2x128xf32> to vector<2x128xf32>
    %c0_2 = arith.constant 0 : index
    %c1 = arith.constant 1 : index
    %5 = arith.index_cast %1 : i32 to index
    %c0_3 = arith.constant 0 : index
    %6 = vector.load %arg5[%c0_2, %c1, %5, %c0_3] : memref<1x4x2x128xf32, #tpu.memory_space<vmem>>, vector<1x1x2x128xf32>
    %7 = vector.shape_cast %6 : vector<1x1x2x128xf32> to vector<2x128xf32>
    %c0_4 = arith.constant 0 : index
    %c2 = arith.constant 2 : index
    %8 = arith.index_cast %1 : i32 to index
    %c0_5 = arith.constant 0 : index
    %9 = vector.load %arg5[%c0_4, %c2, %8, %c0_5] : memref<1x4x2x128xf32, #tpu.memory_space<vmem>>, vector<1x1x2x128xf32>
    %10 = vector.shape_cast %9 : vector<1x1x2x128xf32> to vector<2x128xf32>
    %c0_6 = arith.constant 0 : index
    %c3 = arith.constant 3 : index
    %11 = arith.index_cast %1 : i32 to index
    %c0_7 = arith.constant 0 : index
    %12 = vector.load %arg5[%c0_6, %c3, %11, %c0_7] : memref<1x4x2x128xf32, #tpu.memory_space<vmem>>, vector<1x1x2x128xf32>
    %13 = vector.shape_cast %12 : vector<1x1x2x128xf32> to vector<2x128xf32>
    %c0_8 = arith.constant 0 : index
    %c0_9 = arith.constant 0 : index
    %14 = arith.index_cast %1 : i32 to index
    %c0_10 = arith.constant 0 : index
    %15 = vector.load %arg4[%c0_8, %c0_9, %14, %c0_10] : memref<1x4x2x128xf32, #tpu.memory_space<vmem>>, vector<1x1x2x128xf32>
    %16 = vector.shape_cast %15 : vector<1x1x2x128xf32> to vector<2x128xf32>
    %c0_11 = arith.constant 0 : index
    %17 = memref.load %arg3[%c0_11] : memref<4xf32, #tpu.memory_space<smem>>
    %18 = vector.broadcast %17 : f32 to vector<2x128xf32>
    %19 = arith.addf %16, %18 : vector<2x128xf32>
    %c0_12 = arith.constant 0 : index
    %c0_13 = arith.constant 0 : index
    %20 = memref.load %arg2[%c0_12, %c0_13] : memref<4x4xf32, #tpu.memory_space<smem>>
    %21 = vector.broadcast %20 : f32 to vector<2x128xf32>
    %22 = arith.mulf %21, %4 : vector<2x128xf32>
    %23 = arith.addf %19, %22 : vector<2x128xf32>
    %c0_14 = arith.constant 0 : index
    %c1_15 = arith.constant 1 : index
    %24 = memref.load %arg2[%c0_14, %c1_15] : memref<4x4xf32, #tpu.memory_space<smem>>
    %25 = vector.broadcast %24 : f32 to vector<2x128xf32>
    %26 = arith.mulf %25, %7 : vector<2x128xf32>
    %27 = arith.addf %23, %26 : vector<2x128xf32>
    %c0_16 = arith.constant 0 : index
    %c2_17 = arith.constant 2 : index
    %28 = memref.load %arg2[%c0_16, %c2_17] : memref<4x4xf32, #tpu.memory_space<smem>>
    %29 = vector.broadcast %28 : f32 to vector<2x128xf32>
    %30 = arith.mulf %29, %10 : vector<2x128xf32>
    %31 = arith.addf %27, %30 : vector<2x128xf32>
    %c0_18 = arith.constant 0 : index
    %c3_19 = arith.constant 3 : index
    %32 = memref.load %arg2[%c0_18, %c3_19] : memref<4x4xf32, #tpu.memory_space<smem>>
    %33 = vector.broadcast %32 : f32 to vector<2x128xf32>
    %34 = arith.mulf %33, %13 : vector<2x128xf32>
    %35 = arith.addf %31, %34 : vector<2x128xf32>
    %cst = arith.constant 0.000000e+00 : f32
    %36 = vector.broadcast %cst : f32 to vector<2x128xf32>
    %37 = arith.maximumf %35, %36 : vector<2x128xf32>
    %c0_20 = arith.constant 0 : index
    %c0_21 = arith.constant 0 : index
    %38 = arith.index_cast %1 : i32 to index
    %c0_22 = arith.constant 0 : index
    %39 = vector.load %arg6[%c0_20, %c0_21, %38, %c0_22] : memref<1x4x2x128xf32, #tpu.memory_space<vmem>>, vector<1x1x2x128xf32>
    %40 = vector.shape_cast %39 : vector<1x1x2x128xf32> to vector<2x128xf32>
    %41 = vector.shape_cast %37 : vector<2x128xf32> to vector<1x1x2x128xf32>
    tpu.vector_store %arg6[%c0_20, %c0_21, %38, %c0_22], %41 {strides = array<i32>} : memref<1x4x2x128xf32, #tpu.memory_space<vmem>>, vector<1x1x2x128xf32>,
    %c0_23 = arith.constant 0 : index
    %c1_24 = arith.constant 1 : index
    %42 = arith.index_cast %1 : i32 to index
    %c0_25 = arith.constant 0 : index
    %43 = vector.load %arg4[%c0_23, %c1_24, %42, %c0_25] : memref<1x4x2x128xf32, #tpu.memory_space<vmem>>, vector<1x1x2x128xf32>
    %44 = vector.shape_cast %43 : vector<1x1x2x128xf32> to vector<2x128xf32>
    %c1_26 = arith.constant 1 : index
    %45 = memref.load %arg3[%c1_26] : memref<4xf32, #tpu.memory_space<smem>>
    %46 = vector.broadcast %45 : f32 to vector<2x128xf32>
    %47 = arith.addf %44, %46 : vector<2x128xf32>
    %c1_27 = arith.constant 1 : index
    %c0_28 = arith.constant 0 : index
    %48 = memref.load %arg2[%c1_27, %c0_28] : memref<4x4xf32, #tpu.memory_space<smem>>
    %49 = vector.broadcast %48 : f32 to vector<2x128xf32>
    %50 = arith.mulf %49, %4 : vector<2x128xf32>
    %51 = arith.addf %47, %50 : vector<2x128xf32>
    %c1_29 = arith.constant 1 : index
    %c1_30 = arith.constant 1 : index
    %52 = memref.load %arg2[%c1_29, %c1_30] : memref<4x4xf32, #tpu.memory_space<smem>>
    %53 = vector.broadcast %52 : f32 to vector<2x128xf32>
    %54 = arith.mulf %53, %7 : vector<2x128xf32>
    %55 = arith.addf %51, %54 : vector<2x128xf32>
    %c1_31 = arith.constant 1 : index
    %c2_32 = arith.constant 2 : index
    %56 = memref.load %arg2[%c1_31, %c2_32] : memref<4x4xf32, #tpu.memory_space<smem>>
    %57 = vector.broadcast %56 : f32 to vector<2x128xf32>
    %58 = arith.mulf %57, %10 : vector<2x128xf32>
    %59 = arith.addf %55, %58 : vector<2x128xf32>
    %c1_33 = arith.constant 1 : index
    %c3_34 = arith.constant 3 : index
    %60 = memref.load %arg2[%c1_33, %c3_34] : memref<4x4xf32, #tpu.memory_space<smem>>
    %61 = vector.broadcast %60 : f32 to vector<2x128xf32>
    %62 = arith.mulf %61, %13 : vector<2x128xf32>
    %63 = arith.addf %59, %62 : vector<2x128xf32>
    %cst_35 = arith.constant 0.000000e+00 : f32
    %64 = vector.broadcast %cst_35 : f32 to vector<2x128xf32>
    %65 = arith.maximumf %63, %64 : vector<2x128xf32>
    %c0_36 = arith.constant 0 : index
    %c1_37 = arith.constant 1 : index
    %66 = arith.index_cast %1 : i32 to index
    %c0_38 = arith.constant 0 : index
    %67 = vector.load %arg6[%c0_36, %c1_37, %66, %c0_38] : memref<1x4x2x128xf32, #tpu.memory_space<vmem>>, vector<1x1x2x128xf32>
    %68 = vector.shape_cast %67 : vector<1x1x2x128xf32> to vector<2x128xf32>
    %69 = vector.shape_cast %65 : vector<2x128xf32> to vector<1x1x2x128xf32>
    tpu.vector_store %arg6[%c0_36, %c1_37, %66, %c0_38], %69 {strides = array<i32>} : memref<1x4x2x128xf32, #tpu.memory_space<vmem>>, vector<1x1x2x128xf32>,
    %c0_39 = arith.constant 0 : index
    %c2_40 = arith.constant 2 : index
    %70 = arith.index_cast %1 : i32 to index
    %c0_41 = arith.constant 0 : index
    %71 = vector.load %arg4[%c0_39, %c2_40, %70, %c0_41] : memref<1x4x2x128xf32, #tpu.memory_space<vmem>>, vector<1x1x2x128xf32>
    %72 = vector.shape_cast %71 : vector<1x1x2x128xf32> to vector<2x128xf32>
    %c2_42 = arith.constant 2 : index
    %73 = memref.load %arg3[%c2_42] : memref<4xf32, #tpu.memory_space<smem>>
    %74 = vector.broadcast %73 : f32 to vector<2x128xf32>
    %75 = arith.addf %72, %74 : vector<2x128xf32>
    %c2_43 = arith.constant 2 : index
    %c0_44 = arith.constant 0 : index
    %76 = memref.load %arg2[%c2_43, %c0_44] : memref<4x4xf32, #tpu.memory_space<smem>>
    %77 = vector.broadcast %76 : f32 to vector<2x128xf32>
    %78 = arith.mulf %77, %4 : vector<2x128xf32>
    %79 = arith.addf %75, %78 : vector<2x128xf32>
    %c2_45 = arith.constant 2 : index
    %c1_46 = arith.constant 1 : index
    %80 = memref.load %arg2[%c2_45, %c1_46] : memref<4x4xf32, #tpu.memory_space<smem>>
    %81 = vector.broadcast %80 : f32 to vector<2x128xf32>
    %82 = arith.mulf %81, %7 : vector<2x128xf32>
    %83 = arith.addf %79, %82 : vector<2x128xf32>
    %c2_47 = arith.constant 2 : index
    %c2_48 = arith.constant 2 : index
    %84 = memref.load %arg2[%c2_47, %c2_48] : memref<4x4xf32, #tpu.memory_space<smem>>
    %85 = vector.broadcast %84 : f32 to vector<2x128xf32>
    %86 = arith.mulf %85, %10 : vector<2x128xf32>
    %87 = arith.addf %83, %86 : vector<2x128xf32>
    %c2_49 = arith.constant 2 : index
    %c3_50 = arith.constant 3 : index
    %88 = memref.load %arg2[%c2_49, %c3_50] : memref<4x4xf32, #tpu.memory_space<smem>>
    %89 = vector.broadcast %88 : f32 to vector<2x128xf32>
    %90 = arith.mulf %89, %13 : vector<2x128xf32>
    %91 = arith.addf %87, %90 : vector<2x128xf32>
    %cst_51 = arith.constant 0.000000e+00 : f32
    %92 = vector.broadcast %cst_51 : f32 to vector<2x128xf32>
    %93 = arith.maximumf %91, %92 : vector<2x128xf32>
    %c0_52 = arith.constant 0 : index
    %c2_53 = arith.constant 2 : index
    %94 = arith.index_cast %1 : i32 to index
    %c0_54 = arith.constant 0 : index
    %95 = vector.load %arg6[%c0_52, %c2_53, %94, %c0_54] : memref<1x4x2x128xf32, #tpu.memory_space<vmem>>, vector<1x1x2x128xf32>
    %96 = vector.shape_cast %95 : vector<1x1x2x128xf32> to vector<2x128xf32>
    %97 = vector.shape_cast %93 : vector<2x128xf32> to vector<1x1x2x128xf32>
    tpu.vector_store %arg6[%c0_52, %c2_53, %94, %c0_54], %97 {strides = array<i32>} : memref<1x4x2x128xf32, #tpu.memory_space<vmem>>, vector<1x1x2x128xf32>,
    %c0_55 = arith.constant 0 : index
    %c3_56 = arith.constant 3 : index
    %98 = arith.index_cast %1 : i32 to index
    %c0_57 = arith.constant 0 : index
    %99 = vector.load %arg4[%c0_55, %c3_56, %98, %c0_57] : memref<1x4x2x128xf32, #tpu.memory_space<vmem>>, vector<1x1x2x128xf32>
    %100 = vector.shape_cast %99 : vector<1x1x2x128xf32> to vector<2x128xf32>
    %c3_58 = arith.constant 3 : index
    %101 = memref.load %arg3[%c3_58] : memref<4xf32, #tpu.memory_space<smem>>
    %102 = vector.broadcast %101 : f32 to vector<2x128xf32>
    %103 = arith.addf %100, %102 : vector<2x128xf32>
    %c3_59 = arith.constant 3 : index
    %c0_60 = arith.constant 0 : index
    %104 = memref.load %arg2[%c3_59, %c0_60] : memref<4x4xf32, #tpu.memory_space<smem>>
    %105 = vector.broadcast %104 : f32 to vector<2x128xf32>
    %106 = arith.mulf %105, %4 : vector<2x128xf32>
    %107 = arith.addf %103, %106 : vector<2x128xf32>
    %c3_61 = arith.constant 3 : index
    %c1_62 = arith.constant 1 : index
    %108 = memref.load %arg2[%c3_61, %c1_62] : memref<4x4xf32, #tpu.memory_space<smem>>
    %109 = vector.broadcast %108 : f32 to vector<2x128xf32>
    %110 = arith.mulf %109, %7 : vector<2x128xf32>
    %111 = arith.addf %107, %110 : vector<2x128xf32>
    %c3_63 = arith.constant 3 : index
    %c2_64 = arith.constant 2 : index
    %112 = memref.load %arg2[%c3_63, %c2_64] : memref<4x4xf32, #tpu.memory_space<smem>>
    %113 = vector.broadcast %112 : f32 to vector<2x128xf32>
    %114 = arith.mulf %113, %10 : vector<2x128xf32>
    %115 = arith.addf %111, %114 : vector<2x128xf32>
    %c3_65 = arith.constant 3 : index
    %c3_66 = arith.constant 3 : index
    %116 = memref.load %arg2[%c3_65, %c3_66] : memref<4x4xf32, #tpu.memory_space<smem>>
    %117 = vector.broadcast %116 : f32 to vector<2x128xf32>
    %118 = arith.mulf %117, %13 : vector<2x128xf32>
    %119 = arith.addf %115, %118 : vector<2x128xf32>
    %cst_67 = arith.constant 0.000000e+00 : f32
    %120 = vector.broadcast %cst_67 : f32 to vector<2x128xf32>
    %121 = arith.maximumf %119, %120 : vector<2x128xf32>
    %c0_68 = arith.constant 0 : index
    %c3_69 = arith.constant 3 : index
    %122 = arith.index_cast %1 : i32 to index
    %c0_70 = arith.constant 0 : index
    %123 = vector.load %arg6[%c0_68, %c3_69, %122, %c0_70] : memref<1x4x2x128xf32, #tpu.memory_space<vmem>>, vector<1x1x2x128xf32>
    %124 = vector.shape_cast %123 : vector<1x1x2x128xf32> to vector<2x128xf32>
    %125 = vector.shape_cast %121 : vector<2x128xf32> to vector<1x1x2x128xf32>
    tpu.vector_store %arg6[%c0_68, %c3_69, %122, %c0_70], %125 {strides = array<i32>} : memref<1x4x2x128xf32, #tpu.memory_space<vmem>>, vector<1x1x2x128xf32>,
    %c1_i32 = arith.constant 1 : i32
    return
  }
  func.func @transform_0(%arg0: i32, %arg1: i32) -> (i32, i32) {
    %c0_i32 = arith.constant 0 : i32
    %c0_i32_0 = arith.constant 0 : i32
    %c0_i32_1 = arith.constant 0 : i32
    return %c0_i32, %c0_i32_0 : i32, i32
  }
  func.func @transform_1(%arg0: i32, %arg1: i32) -> i32 {
    %c0_i32 = arith.constant 0 : i32
    %c0_i32_0 = arith.constant 0 : i32
    return %c0_i32 : i32
  }
  func.func @transform_2(%arg0: i32, %arg1: i32) -> (i32, i32, i32, i32) {
    %c0_i32 = arith.constant 0 : i32
    %c0_i32_0 = arith.constant 0 : i32
    %c0_i32_1 = arith.constant 0 : i32
    return %arg0, %c0_i32, %arg1, %c0_i32_0 : i32, i32, i32, i32
  }
  func.func @transform_3(%arg0: i32, %arg1: i32) -> (i32, i32, i32, i32) {
    %c0_i32 = arith.constant 0 : i32
    %c0_i32_0 = arith.constant 0 : i32
    %c0_i32_1 = arith.constant 0 : i32
    return %arg0, %c0_i32, %arg1, %c0_i32_0 : i32, i32, i32, i32
  }
  func.func @transform_4(%arg0: i32, %arg1: i32) -> (i32, i32, i32, i32) {
    %c0_i32 = arith.constant 0 : i32
    %c0_i32_0 = arith.constant 0 : i32
    %c0_i32_1 = arith.constant 0 : i32
    return %arg0, %c0_i32, %arg1, %c0_i32_0 : i32, i32, i32, i32
  }
}

</mosaic_0001>

<llo_original>
// kernel: tpu_custom_call.1
$region0: #{tpu_custom_call.1}
  #allocation0 [shape = 'u32[]', space=smem, size = 0x4, offset = 0x4, fixed_abs, tag = 'smem constant byte address 0x4 - core index']
  #allocation1 [shape = 'u32[144,128]{1,0:T(1,128)}', space=vmem, size = 0x12000, scoped, tag = 'internal scratch']
  %s0 = inlined_call_operand.hbm [shape: f32[4,4], index: 0, kind: input, shape index: {}]
  %s1 = inlined_call_operand.vmem [shape: f32[4], index: 1, kind: input, shape index: {}]
  %s2 = inlined_call_operand.hbm [shape: f32[2,4,2,128], index: 2, kind: input, shape index: {}]
  %s3 = inlined_call_operand.hbm [shape: f32[2,4,2,128], index: 3, kind: input, shape index: {}]
  %s4 = inlined_call_operand.hbm [shape: f32[2,4,2,128], index: 4, kind: output, shape index: {}]
  %s5 = sld [smem:[#allocation0]]
  $region65: #{tpu_custom_call.1} parent=0
    _
  %s7 = ssub.s32 1, %s5
  %s8 = scalar_select 0, %s7, %s5
  $region1: #{tpu_custom_call.1} parent=0
    #allocation2 [shape = 'u8[2048]{0}', space=smem, size = 0x800, scoped, tag = 'input window, operand 0, single buffered']
    #allocation3 [shape = 's32[2]{0}', space=sflag, size = 0x8, scoped, tag = 'scoped memory for tpu_custom_call.1']
    #allocation4 [shape = 's32[2]{0}', space=sflag, size = 0x8, scoped, tag = 'scoped memory for tpu_custom_call.1']
    #allocation5 [shape = 's32[2]{0}', space=sflag, size = 0x8, scoped, tag = 'scoped memory for tpu_custom_call.1']
    #allocation6 [shape = 's32[2]{0}', space=sflag, size = 0x8, scoped, tag = 'scoped memory for tpu_custom_call.1']
    #allocation7 [shape = 'u8[512]{0}', space=smem, size = 0x200, scoped, tag = 'input window, operand 1, single buffered']
    #allocation8 [shape = 'u8[8192]{0}', space=vmem, size = 0x2000, scoped, tag = 'input window, operand 2']
    #allocation9 [shape = 'u8[8192]{0}', space=vmem, size = 0x2000, scoped, tag = 'input window, operand 3']
    #allocation10 [shape = 's32[2]{0}', space=sflag, size = 0x8, scoped, tag = 'scoped memory for tpu_custom_call.1']
    #allocation11 [shape = 'u8[8192]{0}', space=vmem, size = 0x2000, scoped, tag = 'output window, operand 0']
    %9 = vsyncpa [#allocation5], 0
    %10 = vsyncpa [#allocation6], 0
    %11 = vsyncpa [#allocation3], 0
    %s12 = scalar_lea.sflag [#allocation3], 1
    %13 = vsyncpa %s12, 0
    %14 = vsyncpa [#allocation10], 0
    %s15 = scalar_lea.sflag [#allocation10], 1
    %16 = vsyncpa %s15, 0
    %17 = vsyncpa [#allocation4], 0
    %s18 = scalar_lea.sflag [#allocation4], 1
    %19 = vsyncpa %s18, 0
    loop: start=0, step=1, limit=4
    $region2: #{tpu_custom_call.1} parent=1 // loop_pre_header
      _
    $region3: #{tpu_custom_call.1} parent=1 // loop_header
      %s21 = sphi 0, %s25
      %p22 = scmp.ge.s32.totalorder %s21, 4
      %s28 = sphi 0, %s40
      %s29 = sphi 0, %s36
      %s30 = sphi 0, %s28
      %s31 = sphi 0, %s29
      %s32 = sphi 0, %s30
      %s33 = sphi 0, %s31
      %s41 = sphi 0, %s41
      %s43 = sphi 0, %s41
      %s44 = sphi 0, %s43
      %s58 = sphi 0, %s44
      %s62 = sphi 0, %s62
      %s64 = sphi 0, %s62
      %s65 = sphi 0, %s64
      %s79 = sphi 0, %s65
      %s87 = sphi 0, %s89
      %s90 = sphi 0, %s87
      %s91 = sphi 0, %s90
      %s107 = sphi 0, %s91
      %s115 = sphi 0, %s117
      %s118 = sphi 0, %s115
      %s119 = sphi 0, %s118
      %s135 = sphi 0, %s119
      %s143 = sphi 0, %s145
      %s146 = sphi 0, %s143
      %s147 = sphi 0, %s146
      %s163 = sphi 0, %s147
    $region4: #{tpu_custom_call.1} parent=1 // loop_header_branch
      %24 = sbr.rel (%p22) target = $region8
    $region5: #{tpu_custom_call.1} parent=1 // loop_body
      %s26 = ssub.s32 %s21, 1
      %s27 = ssub.s32 %s21, 2
      %s34 = sadd.s32 1, %s29
      %p35 = scmp.ge.s32.totalorder %s34, 1
      %s36 = scalar_select %p35, 0, %s34
      %s37 = sadd.s32 1, %s28
      %s38 = scalar_select %p35, %s37, %s28
      %p39 = scmp.ge.s32.totalorder %s38, 2
      %s40 = scalar_select %p39, 0, %s38
      %s42 = sadd.s32 %s41, 1
      %p45 = scmp.eq.s32.totalorder %s21, 1
      %p46 = scmp.ne.s32.totalorder %s41, %s43
      %p47 = scmp.eq.s32.totalorder %s21, 0
      %p48 = por %p46, %p47
      %p49 = scmp.ne.s32.totalorder %s41, %s43
      %p50 = scmp.eq.s32.totalorder %s26, 1
      %p51 = por %p49, %p50
      %p52 = scmp.ne.s32.totalorder %s43, %s44
      %p53 = scmp.eq.s32.totalorder %s26, 0
      %p54 = por %p52, %p53
      %p55 = scmp.ne.s32.totalorder %s43, %s44
      %p56 = scmp.eq.s32.totalorder %s27, 1
      %p57 = por %p55, %p56
      %p59 = scmp.ne.s32.totalorder %s44, %s58
      %p60 = scmp.eq.s32.totalorder %s27, 0
      %p61 = por %p59, %p60
      %s63 = sadd.s32 %s62, 1
      %p66 = scmp.eq.s32.totalorder %s21, 1
      %p67 = scmp.ne.s32.totalorder %s62, %s64
      %p68 = scmp.eq.s32.totalorder %s21, 0
      %p69 = por %p67, %p68
      %p70 = scmp.ne.s32.totalorder %s62, %s64
      %p71 = scmp.eq.s32.totalorder %s26, 1
      %p72 = por %p70, %p71
      %p73 = scmp.ne.s32.totalorder %s64, %s65
      %p74 = scmp.eq.s32.totalorder %s26, 0
      %p75 = por %p73, %p74
      %p76 = scmp.ne.s32.totalorder %s64, %s65
      %p77 = scmp.eq.s32.totalorder %s27, 1
      %p78 = por %p76, %p77
      %p80 = scmp.ne.s32.totalorder %s65, %s79
      %p81 = scmp.eq.s32.totalorder %s27, 0
      %p82 = por %p80, %p81
      %s83 = ssub.s32 %s28, %s40
      %s84 = ssub.s32 %s29, %s36
      %s85 = sor.u32 %s83, %s84
      %p86 = scmp.eq.s32.totalorder %s85, 0
      %s88 = sadd.s32 %s87, 1
      %s89 = scalar_select %p86, %s87, %s88
      %p92 = pneg %p86
      %p93 = scmp.eq.s32.totalorder %s21, 1
      %p94 = por %p92, %p93
      %p95 = scmp.ne.s32.totalorder %s87, %s90
      %p96 = scmp.eq.s32.totalorder %s21, 0
      %p97 = por %p95, %p96
      %p98 = scmp.ne.s32.totalorder %s87, %s90
      %p99 = scmp.eq.s32.totalorder %s26, 1
      %p100 = por %p98, %p99
      %p101 = scmp.ne.s32.totalorder %s90, %s91
      %p102 = scmp.eq.s32.totalorder %s26, 0
      %p103 = por %p101, %p102
      %p104 = scmp.ne.s32.totalorder %s90, %s91
      %p105 = scmp.eq.s32.totalorder %s27, 1
      %p106 = por %p104, %p105
      %p108 = scmp.ne.s32.totalorder %s91, %s107
      %p109 = scmp.eq.s32.totalorder %s27, 0
      %p110 = por %p108, %p109
      %s111 = ssub.s32 %s28, %s40
      %s112 = ssub.s32 %s29, %s36
      %s113 = sor.u32 %s111, %s112
      %p114 = scmp.eq.s32.totalorder %s113, 0
      %s116 = sadd.s32 %s115, 1
      %s117 = scalar_select %p114, %s115, %s116
      %p120 = pneg %p114
      %p121 = scmp.eq.s32.totalorder %s21, 1
      %p122 = por %p120, %p121
      %p123 = scmp.ne.s32.totalorder %s115, %s118
      %p124 = scmp.eq.s32.totalorder %s21, 0
      %p125 = por %p123, %p124
      %p126 = scmp.ne.s32.totalorder %s115, %s118
      %p127 = scmp.eq.s32.totalorder %s26, 1
      %p128 = por %p126, %p127
      %p129 = scmp.ne.s32.totalorder %s118, %s119
      %p130 = scmp.eq.s32.totalorder %s26, 0
      %p131 = por %p129, %p130
      %p132 = scmp.ne.s32.totalorder %s118, %s119
      %p133 = scmp.eq.s32.totalorder %s27, 1
      %p134 = por %p132, %p133
      %p136 = scmp.ne.s32.totalorder %s119, %s135
      %p137 = scmp.eq.s32.totalorder %s27, 0
      %p138 = por %p136, %p137
      %s139 = ssub.s32 %s28, %s40
      %s140 = ssub.s32 %s29, %s36
      %s141 = sor.u32 %s139, %s140
      %p142 = scmp.eq.s32.totalorder %s141, 0
      %s144 = sadd.s32 %s143, 1
      %s145 = scalar_select %p142, %s143, %s144
      %p148 = pneg %p142
      %p149 = scmp.eq.s32.totalorder %s21, 1
      %p150 = por %p148, %p149
      %p151 = scmp.ne.s32.totalorder %s143, %s146
      %p152 = scmp.eq.s32.totalorder %s21, 0
      %p153 = por %p151, %p152
      %p154 = scmp.ne.s32.totalorder %s143, %s146
      %p155 = scmp.eq.s32.totalorder %s26, 1
      %p156 = por %p154, %p155
      %p157 = scmp.ne.s32.totalorder %s146, %s147
      %p158 = scmp.eq.s32.totalorder %s26, 0
      %p159 = por %p157, %p158
      %p160 = scmp.ne.s32.totalorder %s146, %s147
      %p161 = scmp.eq.s32.totalorder %s27, 1
      %p162 = por %p160, %p161
      %p164 = scmp.ne.s32.totalorder %s147, %s163
      %p165 = scmp.eq.s32.totalorder %s27, 0
      %p166 = por %p164, %p165
      %p167 = scmp.le.s32.totalorder 1, %s21
      %p168 = scmp.lt.s32.totalorder %s21, 3
      %p169 = pnand %p167, %p168
      %p170 = pneg %p169
      // Predicated region
      $region9: #{tpu_custom_call.1} parent=5 // pred_check
        _
      $region10: #{tpu_custom_call.1} parent=5 // pred_check_branch
        %172 = sbr.rel (%p169) target = $region12
      $region11: #{tpu_custom_call.1} parent=5 // pred_region
        %s173 = ssub.s32 %s21, 1
        // Predicated region
        $region13: #{tpu_custom_call.1} parent=11 // pred_check
          %p174 = pneg %p54
        $region14: #{tpu_custom_call.1} parent=11 // pred_check_branch
          %176 = sbr.rel (%p174) target = $region16
        $region15: #{tpu_custom_call.1} parent=11 // pred_region
          %s178 = ssub.s32 64, 64
          %179 = vsyncadd [#allocation5], %s178
          %182 = dma.hbm_to_smem %s0, 64, [#allocation2], [#allocation5]
        $region16: #{tpu_custom_call.1} parent=11 // pred_fallthru
          _
        // Predicated region
        $region17: #{tpu_custom_call.1} parent=11 // pred_check
          %p183 = pneg %p75
        $region18: #{tpu_custom_call.1} parent=11 // pred_check_branch
          %185 = sbr.rel (%p183) target = $region20
        $region19: #{tpu_custom_call.1} parent=11 // pred_region
          %s187 = ssub.s32 16, 16
          %188 = vsyncadd [#allocation6], %s187
          %s190 = sshll.u32 %s1, 4
          %s191 = int_to_ptr.vmem [resolvable:$true] %s190
          %193 = dma.vmem_to_smem %s191, 16, [#allocation7], [#allocation6]
        $region20: #{tpu_custom_call.1} parent=11 // pred_fallthru
          _
      $region12: #{tpu_custom_call.1} parent=5 // pred_fallthru
        _
      %p194 = scmp.lt.s32.totalorder %s21, 2
      // Predicated region
      $region21: #{tpu_custom_call.1} parent=5 // pred_check
        %p195 = pneg %p194
      $region22: #{tpu_custom_call.1} parent=5 // pred_check_branch
        %197 = sbr.rel (%p195) target = $region24
      $region23: #{tpu_custom_call.1} parent=5 // pred_region
        // Predicated region
        $region25: #{tpu_custom_call.1} parent=23 // pred_check
          %p198 = pneg %p97
        $region26: #{tpu_custom_call.1} parent=23 // pred_check_branch
          %200 = sbr.rel (%p198) target = $region28
        $region27: #{tpu_custom_call.1} parent=23 // pred_region
          %s201 = sand.u32 %s87, 1
          %s202 = scalar_lea.sflag [#allocation3], %s201
          %s203 = sand.u32 %s87, 1
          %s204 = smul.addr %s203, 8
          %s205 = scalar_lea.vmem [#allocation8], %s204
          %s207 = ssub.s32 128, 128
          %208 = vsyncadd %s202, %s207
          %s209 = smul.addr %s28, 4
          %s210 = sadd.s32 %s29, %s209
          %s211 = smul.addr %s210, 32
          %s212 = scalar_lea.hbm %s2, %s211
          %s213 = sshll.u32 %s205, 4
          %s214 = int_to_ptr.vmem [resolvable:$true] %s213
          %219 = dma.hbm_to_vmem [thread:$0]  %s212, 128, %s214, %s202, 32, 32, 2
        $region28: #{tpu_custom_call.1} parent=23 // pred_fallthru
          _
        // Predicated region
        $region29: #{tpu_custom_call.1} parent=23 // pred_check
          %p220 = pneg %p125
        $region30: #{tpu_custom_call.1} parent=23 // pred_check_branch
          %222 = sbr.rel (%p220) target = $region32
        $region31: #{tpu_custom_call.1} parent=23 // pred_region
          %s223 = sand.u32 %s115, 1
          %s224 = scalar_lea.sflag [#allocation10], %s223
          %s225 = sand.u32 %s115, 1
          %s226 = smul.addr %s225, 8
          %s227 = scalar_lea.vmem [#allocation9], %s226
          %s229 = ssub.s32 128, 128
          %230 = vsyncadd %s224, %s229
          %s231 = smul.addr %s28, 4
          %s232 = sadd.s32 %s29, %s231
          %s233 = smul.addr %s232, 32
          %s234 = scalar_lea.hbm %s3, %s233
          %s235 = sshll.u32 %s227, 4
          %s236 = int_to_ptr.vmem [resolvable:$true] %s235
          %241 = dma.hbm_to_vmem [thread:$0]  %s234, 128, %s236, %s224, 32, 32, 2
        $region32: #{tpu_custom_call.1} parent=23 // pred_fallthru
          _
      $region24: #{tpu_custom_call.1} parent=5 // pred_fallthru
        _
      %p242 = scmp.le.s32.totalorder 1, %s21
      %p243 = scmp.lt.s32.totalorder %s21, 3
      %p244 = pnand %p242, %p243
      %p245 = pneg %p244
      // Predicated region
      $region33: #{tpu_custom_call.1} parent=5 // pred_check
        _
      $region34: #{tpu_custom_call.1} parent=5 // pred_check_branch
        %247 = sbr.rel (%p244) target = $region36
      $region35: #{tpu_custom_call.1} parent=5 // pred_region
        %s248 = ssub.s32 %s21, 1
        // Predicated region
        $region37: #{tpu_custom_call.1} parent=35 // pred_check
          %p249 = pneg %p54
        $region38: #{tpu_custom_call.1} parent=35 // pred_check_branch
          %251 = sbr.rel (%p249) target = $region40
        $region39: #{tpu_custom_call.1} parent=35 // pred_region
          %252 = dma.done [#allocation5], 64
        $region40: #{tpu_custom_call.1} parent=35 // pred_fallthru
          _
        // Predicated region
        $region41: #{tpu_custom_call.1} parent=35 // pred_check
          %p253 = pneg %p75
        $region42: #{tpu_custom_call.1} parent=35 // pred_check_branch
          %255 = sbr.rel (%p253) target = $region44
        $region43: #{tpu_custom_call.1} parent=35 // pred_region
          %256 = dma.done [#allocation6], 16
        $region44: #{tpu_custom_call.1} parent=35 // pred_fallthru
          _
        %s257 = sand.u32 %s90, 1
        %s258 = scalar_lea.sflag [#allocation3], %s257
        %s259 = sand.u32 %s90, 1
        %s260 = smul.addr %s259, 8
        %s261 = scalar_lea.vmem [#allocation8], %s260
        // Predicated region
        $region45: #{tpu_custom_call.1} parent=35 // pred_check
          %p262 = pneg %p103
        $region46: #{tpu_custom_call.1} parent=35 // pred_check_branch
          %264 = sbr.rel (%p262) target = $region48
        $region47: #{tpu_custom_call.1} parent=35 // pred_region
          %265 = dma.done %s258, 128
        $region48: #{tpu_custom_call.1} parent=35 // pred_fallthru
          _
        %s266 = sand.u32 %s118, 1
        %s267 = scalar_lea.sflag [#allocation10], %s266
        %s268 = sand.u32 %s118, 1
        %s269 = smul.addr %s268, 8
        %s270 = scalar_lea.vmem [#allocation9], %s269
        // Predicated region
        $region49: #{tpu_custom_call.1} parent=35 // pred_check
          %p271 = pneg %p131
        $region50: #{tpu_custom_call.1} parent=35 // pred_check_branch
          %273 = sbr.rel (%p271) target = $region52
        $region51: #{tpu_custom_call.1} parent=35 // pred_region
          %274 = dma.done %s267, 128
        $region52: #{tpu_custom_call.1} parent=35 // pred_fallthru
          _
        %275 = sfence
        %p276 = pneg %p54
        %p277 = pneg %p51
        %p278 = pneg %p75
        %p279 = pneg %p72
        %s280 = sand.u32 %s90, 1
        %s281 = scalar_lea.sflag [#allocation3], %s280
        %s282 = sand.u32 %s90, 1
        %s283 = smul.addr %s282, 8
        %s284 = scalar_lea.vmem [#allocation8], %s283
        %p285 = pneg %p103
        %p286 = pneg %p100
        %s287 = sand.u32 %s118, 1
        %s288 = scalar_lea.sflag [#allocation10], %s287
        %s289 = sand.u32 %s118, 1
        %s290 = smul.addr %s289, 8
        %s291 = scalar_lea.vmem [#allocation9], %s290
        %p292 = pneg %p131
        %p293 = pneg %p128
        %p294 = pneg %p159
        %p295 = pneg %p156
        %s296 = sand.u32 %s146, 1
        %s297 = scalar_lea.sflag [#allocation4], %s296
        %s298 = sand.u32 %s146, 1
        %s299 = smul.addr %s298, 8
        %s300 = scalar_lea.vmem [#allocation11], %s299
        %v301 = vld [vmem:[%s270] sm:$0x3]
        %s302 = sadd.s32 0, 2
        %s303 = scalar_lea.vmem %s270, %s302 [#allocation9]
        %v304 = vld [vmem:[%s303] sm:$0x3]
        %s305 = sadd.s32 0, 4
        %s306 = scalar_lea.vmem %s270, %s305 [#allocation9]
        %v307 = vld [vmem:[%s306] sm:$0x3]
        %s308 = sadd.s32 0, 6
        %s309 = scalar_lea.vmem %s270, %s308 [#allocation9]
        %v310 = vld [vmem:[%s309] sm:$0x3]
        %v311 = vld [vmem:[%s261] sm:$0x3]
        %s312 = sld [smem:[#allocation7]]
        %v313 = vstv %s312
        %v314 = vadd.f32 %v311, %v313
        %s315 = sld [smem:[#allocation2]]
        %v316 = vstv %s315
        %v317 = vmul.f32 %v316, %v301
        %v318 = vadd.f32 %v314, %v317
        %s319 = sld [smem:[#allocation2 + $0x1]]
        %v320 = vstv %s319
        %v321 = vmul.f32 %v320, %v304
        %v322 = vadd.f32 %v318, %v321
        %s323 = sld [smem:[#allocation2 + $0x2]]
        %v324 = vstv %s323
        %v325 = vmul.f32 %v324, %v307
        %v326 = vadd.f32 %v322, %v325
        %s327 = sld [smem:[#allocation2 + $0x3]]
        %v328 = vstv %s327
        %v329 = vmul.f32 %v328, %v310
        %v330 = vadd.f32 %v326, %v329
        %v331 = vmax.f32 %v330, 0.0
        %332 = vst [vmem:[%s300] sm:$0x3] %v331
        %s333 = scalar_lea.vmem %s261, %s302 [#allocation8]
        %v334 = vld [vmem:[%s333] sm:$0x3]
        %s335 = sld [smem:[#allocation7 + $0x1]]
        %v336 = vstv %s335
        %v337 = vadd.f32 %v334, %v336
        %s338 = sld [smem:[#allocation2 + $0x80]]
        %v339 = vstv %s338
        %v340 = vmul.f32 %v339, %v301
        %v341 = vadd.f32 %v337, %v340
        %s342 = sld [smem:[#allocation2 + $0x81]]
        %v343 = vstv %s342
        %v344 = vmul.f32 %v343, %v304
        %v345 = vadd.f32 %v341, %v344
        %s346 = sld [smem:[#allocation2 + $0x82]]
        %v347 = vstv %s346
        %v348 = vmul.f32 %v347, %v307
        %v349 = vadd.f32 %v345, %v348
        %s350 = sld [smem:[#allocation2 + $0x83]]
        %v351 = vstv %s350
        %v352 = vmul.f32 %v351, %v310
        %v353 = vadd.f32 %v349, %v352
        %v354 = vmax.f32 %v353, 0.0
        %s355 = scalar_lea.vmem %s300, %s302 [#allocation11]
        %356 = vst [vmem:[%s355] sm:$0x3] %v354
        %s357 = scalar_lea.vmem %s261, %s305 [#allocation8]
        %v358 = vld [vmem:[%s357] sm:$0x3]
        %s359 = sld [smem:[#allocation7 + $0x2]]
        %v360 = vstv %s359
        %v361 = vadd.f32 %v358, %v360
        %s362 = sld [smem:[#allocation2 + $0x100]]
        %v363 = vstv %s362
        %v364 = vmul.f32 %v363, %v301
        %v365 = vadd.f32 %v361, %v364
        %s366 = sld [smem:[#allocation2 + $0x101]]
        %v367 = vstv %s366
        %v368 = vmul.f32 %v367, %v304
        %v369 = vadd.f32 %v365, %v368
        %s370 = sld [smem:[#allocation2 + $0x102]]
        %v371 = vstv %s370
        %v372 = vmul.f32 %v371, %v307
        %v373 = vadd.f32 %v369, %v372
        %s374 = sld [smem:[#allocation2 + $0x103]]
        %v375 = vstv %s374
        %v376 = vmul.f32 %v375, %v310
        %v377 = vadd.f32 %v373, %v376
        %v378 = vmax.f32 %v377, 0.0
        %s379 = scalar_lea.vmem %s300, %s305 [#allocation11]
        %380 = vst [vmem:[%s379] sm:$0x3] %v378
        %s381 = scalar_lea.vmem %s261, %s308 [#allocation8]
        %v382 = vld [vmem:[%s381] sm:$0x3]
        %s383 = sld [smem:[#allocation7 + $0x3]]
        %v384 = vstv %s383
        %v385 = vadd.f32 %v382, %v384
        %s386 = sld [smem:[#allocation2 + $0x180]]
        %v387 = vstv %s386
        %v388 = vmul.f32 %v387, %v301
        %v389 = vadd.f32 %v385, %v388
        %s390 = sld [smem:[#allocation2 + $0x181]]
        %v391 = vstv %s390
        %v392 = vmul.f32 %v391, %v304
        %v393 = vadd.f32 %v389, %v392
        %s394 = sld [smem:[#allocation2 + $0x182]]
        %v395 = vstv %s394
        %v396 = vmul.f32 %v395, %v307
        %v397 = vadd.f32 %v393, %v396
        %s398 = sld [smem:[#allocation2 + $0x183]]
        %v399 = vstv %s398
        %v400 = vmul.f32 %v399, %v310
        %v401 = vadd.f32 %v397, %v400
        %v402 = vmax.f32 %v401, 0.0
        %s403 = scalar_lea.vmem %s300, %s308 [#allocation11]
        %404 = vst [vmem:[%s403] sm:$0x3] %v402
        %s405 = sand.u32 %s146, 1
        %s406 = scalar_lea.sflag [#allocation4], %s405
        %s407 = sand.u32 %s146, 1
        %s408 = smul.addr %s407, 8
        %s409 = scalar_lea.vmem [#allocation11], %s408
        // Predicated region
        $region53: #{tpu_custom_call.1} parent=35 // pred_check
          %p410 = pneg %p156
        $region54: #{tpu_custom_call.1} parent=35 // pred_check_branch
          %412 = sbr.rel (%p410) target = $region56
        $region55: #{tpu_custom_call.1} parent=35 // pred_region
          %s414 = ssub.s32 128, 128
          %415 = vsyncadd %s406, %s414
          %s416 = smul.addr %s30, 4
          %s417 = sadd.s32 %s31, %s416
          %s418 = smul.addr %s417, 32
          %s419 = scalar_lea.hbm %s4, %s418
          %s420 = sshll.u32 %s409, 4
          %s421 = int_to_ptr.vmem [resolvable:$true] %s420
          %426 = dma.vmem_to_hbm [thread:$0]  %s421, 128, %s419, %s406, 32, 32, 2
        $region56: #{tpu_custom_call.1} parent=35 // pred_fallthru
          _
      $region36: #{tpu_custom_call.1} parent=5 // pred_fallthru
        _
      %p427 = scmp.le.s32.totalorder 2, %s21
      // Predicated region
      $region57: #{tpu_custom_call.1} parent=5 // pred_check
        %p428 = pneg %p427
      $region58: #{tpu_custom_call.1} parent=5 // pred_check_branch
        %430 = sbr.rel (%p428) target = $region60
      $region59: #{tpu_custom_call.1} parent=5 // pred_region
        %s431 = ssub.s32 %s21, 2
        // Predicated region
        $region61: #{tpu_custom_call.1} parent=59 // pred_check
          %p432 = pneg %p162
        $region62: #{tpu_custom_call.1} parent=59 // pred_check_branch
          %434 = sbr.rel (%p432) target = $region64
        $region63: #{tpu_custom_call.1} parent=59 // pred_region
          %s435 = sand.u32 %s147, 1
          %s436 = scalar_lea.sflag [#allocation4], %s435
          %s437 = sand.u32 %s147, 1
          %s438 = smul.addr %s437, 8
          %s439 = scalar_lea.vmem [#allocation11], %s438
          %440 = dma.done %s436, 128
        $region64: #{tpu_custom_call.1} parent=59 // pred_fallthru
          _
      $region60: #{tpu_custom_call.1} parent=5 // pred_fallthru
        _
    $region6: #{tpu_custom_call.1} parent=1 // loop_footer
      %s25 = sadd.s32 1, %s21
    $region7: #{tpu_custom_call.1} parent=1 // loop_footer_branch
      %20 = sbr.rel target = $region3
    $region8: #{tpu_custom_call.1} parent=1 // loop_exit
      _
    %441 = vsyncpa [#allocation3], 1
    %s442 = scalar_lea.sflag [#allocation3], 1
    %443 = vsyncpa %s442, 1
    %444 = vsyncpa [#allocation10], 1
    %s445 = scalar_lea.sflag [#allocation10], 1
    %446 = vsyncpa %s445, 1
    %447 = vsyncpa [#allocation4], 1
    %s448 = scalar_lea.sflag [#allocation4], 1
    %449 = vsyncpa %s448, 1
    %450 = vsyncpa [#allocation5], 1
    %s451 = scalar_lea.sflag [#allocation5], 1
    %452 = vsyncpa %s451, 1
    %453 = vsyncpa [#allocation6], 1
    %s454 = scalar_lea.sflag [#allocation6], 1
    %455 = vsyncpa %s454, 1

</llo_original>
